<compile_context>
chip_gen: v5e
topology: v5e:2x2
jax: 0.10.0
libtpu: 0.0.40
codegen_flags: <defaults>
</compile_context>

<pallas_src>
import functools

import jax
import jax.numpy as jnp
from jax.experimental import pallas as pl
from jax.experimental.pallas import tpu as pltpu

IDX_17 = (1, 3, 4, 5, 6, 8, 9, 10, 12, 13, 15, 16, 17, 19, 20, 21, 23)
V_FULL = 25
V_SEL = len(IDX_17)


def _reshape_input_kernel(x_ref, v_ref, t_ref, *, C, mode, pos1):
    # x_ref: (Nb, T, V_FULL*C)  raw input block (T on sublanes, V*C on lanes).
    # v_ref / t_ref: (Nb, C, 17, T) for 'VT', (Nb, C, T, 17) for 'TV'.
    x = x_ref[...]
    if jnp.issubdtype(x.dtype, jnp.floating) and x.dtype.itemsize < 4:
        x = x.astype(jnp.float32)  # upcast once (v5e VPU has no bf16)

    if mode == "VT":
        # Channel-major static gather of the 51 valid lanes: (Nb, T, 17*C).
        sel_all = jnp.concatenate(
            [x[:, :, i * C + c:i * C + c + 1] for c in range(C) for i in IDX_17],
            axis=2)
        # One in-VMEM minor-dims swap puts T on lanes / joints on sublanes,
        # matching the PyTorch (..., 17, T) output layout.
        sel_all = jnp.swapaxes(sel_all, 1, 2)                  # (Nb, 17*C, T)
        for c in range(C):
            sel = sel_all[:, c * V_SEL:(c + 1) * V_SEL, :]     # (Nb, 17, T)
            if pos1:
                sel = sel - sel[:, 0:1, :]                     # subtract joint 0
            # t_jpt[..., t] = sel[..., t] - sel[..., t-1], zero at t == 0
            prev = jnp.concatenate([sel[:, :, :1], sel[:, :, :-1]], axis=2)
            v_ref[:, c, :, :] = sel.astype(v_ref.dtype)
            t_ref[:, c, :, :] = (sel - prev).astype(t_ref.dtype)
    else:  # 'TV' -- the natural (T on sublanes, joints on lanes) layout, no swap.
        for c in range(C):
            sel = jnp.concatenate(
                [x[:, :, i * C + c:i * C + c + 1] for i in IDX_17], axis=2)  # (Nb, T, 17)
            if pos1:
                sel = sel - sel[:, :, 0:1]
            prev = jnp.concatenate([sel[:, :1, :], sel[:, :-1, :]], axis=1)
            v_ref[:, c, :, :] = sel.astype(v_ref.dtype)
            t_ref[:, c, :, :] = (sel - prev).astype(t_ref.dtype)


def _pick_block_batch(n, t, vc, itemsize):
    """Largest divisor of N that (a) keeps >= 2 grid steps so both v7x
    TensorCores get work and (b) keeps the input block under ~2 MiB."""
    if n < 4:
        return 1
    limit = max(1, (2 << 20) // max(1, t * vc * itemsize))
    best = 1
    for nb in range(1, n // 2 + 1):
        if n % nb == 0 and nb <= limit:
            best = nb
    return best


def reshape_input(x, mode="VT", pos1=False, block_batch=None):
    """x: (N, T, V*C) with V == 25, mirroring the PyTorch module's input."""
    assert mode in ("VT", "TV")
    N, T, VC = x.shape
    assert VC % V_FULL == 0
    C = VC // V_FULL

    nb = (_pick_block_batch(N, T, VC, jnp.dtype(x.dtype).itemsize)
          if block_batch is None else block_batch)
    assert N % nb == 0
    grid = (N // nb,)

    if mode == "VT":
        out_shape, out_block = (N, C, V_SEL, T), (nb, C, V_SEL, T)
    else:
        out_shape, out_block = (N, C, T, V_SEL), (nb, C, T, V_SEL)

    out_struct = jax.ShapeDtypeStruct(out_shape, x.dtype)
    kernel = functools.partial(_reshape_input_kernel, C=C, mode=mode, pos1=pos1)

    return pl.pallas_call(
        kernel,
        out_shape=(out_struct, out_struct),
        grid=grid,
        in_specs=[pl.BlockSpec((nb, T, VC), lambda i: (i, 0, 0))],
        out_specs=(
            pl.BlockSpec(out_block, lambda i: (i, 0, 0, 0)),
            pl.BlockSpec(out_block, lambda i: (i, 0, 0, 0)),
        ),
        compiler_params=pltpu.CompilerParams(
            dimension_semantics=("parallel",)),
    )(x)


def _reference(x, mode="VT", pos1=False):
    """Pure-JAX reference reproducing the PyTorch forward exactly."""
    N, T, VC = x.shape
    C = VC // V_FULL
    xi = x.reshape(N, T, V_FULL, C).transpose(0, 3, 2, 1)      # (N, C, 25, T)
    xi = xi[:, :, jnp.array(IDX_17), :]                        # (N, C, 17, T)
    if pos1:
        xi = xi - xi[:, :, 0:1, :]
    diff = xi[:, :, :, 1:] - xi[:, :, :, :-1]
    tj = jnp.concatenate([jnp.zeros_like(xi[:, :, :, :1]), diff], axis=-1)
    if mode == "TV":
        xi = xi.transpose(0, 1, 3, 2)
        tj = tj.transpose(0, 1, 3, 2)
    return xi, tj


if __name__ == "__main__":
    key = jax.random.PRNGKey(0)
    N, T, C = 2, 16, 3                      # module input (N, T, 25*C) = (2, 16, 75)
    x = jax.random.normal(key, (N, T, V_FULL * C), dtype=jnp.float32)

    for mode in ("VT", "TV"):
        for pos1 in (False, True):
            v_out, t_out = reshape_input(x, mode=mode, pos1=pos1)
            jax.block_until_ready((v_out, t_out))
            v_ref, t_ref = _reference(x, mode=mode, pos1=pos1)
            assert v_out.shape == v_ref.shape and t_out.shape == t_ref.shape
            assert jnp.allclose(v_out, v_ref, atol=1e-6), (mode, pos1, "v")
            assert jnp.allclose(t_out, t_ref, atol=1e-6), (mode, pos1, "t")

    print("KERNEL_OK")
</pallas_src>

<mosaic_0001>
module attributes {stable_mosaic.version = 11 : i64} {
  func.func @_reshape_input_kernel(%arg0: i32, %arg1: memref<1x16x75xf32, #tpu.memory_space<vmem>>, %arg2: memref<1x3x17x16xf32, #tpu.memory_space<vmem>>, %arg3: memref<1x3x17x16xf32, #tpu.memory_space<vmem>>) attributes {dimension_semantics = [#tpu.dimension_semantics<parallel>], iteration_bounds = array<i64: 2>, scalar_prefetch = 0 : i64, scratch_operands = 0 : i64, tpu.core_type = #tpu.core_type<tc>, window_params = [{transform_indices = @transform_0, window_bounds = array<i64: 1, 16, 75>}, {transform_indices = @transform_1, window_bounds = array<i64: 1, 3, 17, 16>}, {transform_indices = @transform_2, window_bounds = array<i64: 1, 3, 17, 16>}]} {
    %c0 = arith.constant 0 : index
    %c0_0 = arith.constant 0 : index
    %c0_1 = arith.constant 0 : index
    %0 = vector.load %arg1[%c0, %c0_0, %c0_1] : memref<1x16x75xf32, #tpu.memory_space<vmem>>, vector<1x16x75xf32>
    %1 = vector.extract_strided_slice %0 {offsets = [0, 0, 3], sizes = [1, 16, 1], strides = [1, 1, 1]} : vector<1x16x75xf32> to vector<1x16x1xf32>
    %2 = vector.extract_strided_slice %0 {offsets = [0, 0, 9], sizes = [1, 16, 1], strides = [1, 1, 1]} : vector<1x16x75xf32> to vector<1x16x1xf32>
    %3 = vector.extract_strided_slice %0 {offsets = [0, 0, 12], sizes = [1, 16, 1], strides = [1, 1, 1]} : vector<1x16x75xf32> to vector<1x16x1xf32>
    %4 = vector.extract_strided_slice %0 {offsets = [0, 0, 15], sizes = [1, 16, 1], strides = [1, 1, 1]} : vector<1x16x75xf32> to vector<1x16x1xf32>
    %5 = vector.extract_strided_slice %0 {offsets = [0, 0, 18], sizes = [1, 16, 1], strides = [1, 1, 1]} : vector<1x16x75xf32> to vector<1x16x1xf32>
    %6 = vector.extract_strided_slice %0 {offsets = [0, 0, 24], sizes = [1, 16, 1], strides = [1, 1, 1]} : vector<1x16x75xf32> to vector<1x16x1xf32>
    %7 = vector.extract_strided_slice %0 {offsets = [0, 0, 27], sizes = [1, 16, 1], strides = [1, 1, 1]} : vector<1x16x75xf32> to vector<1x16x1xf32>
    %8 = vector.extract_strided_slice %0 {offsets = [0, 0, 30], sizes = [1, 16, 1], strides = [1, 1, 1]} : vector<1x16x75xf32> to vector<1x16x1xf32>
    %9 = vector.extract_strided_slice %0 {offsets = [0, 0, 36], sizes = [1, 16, 1], strides = [1, 1, 1]} : vector<1x16x75xf32> to vector<1x16x1xf32>
    %10 = vector.extract_strided_slice %0 {offsets = [0, 0, 39], sizes = [1, 16, 1], strides = [1, 1, 1]} : vector<1x16x75xf32> to vector<1x16x1xf32>
    %11 = vector.extract_strided_slice %0 {offsets = [0, 0, 45], sizes = [1, 16, 1], strides = [1, 1, 1]} : vector<1x16x75xf32> to vector<1x16x1xf32>
    %12 = vector.extract_strided_slice %0 {offsets = [0, 0, 48], sizes = [1, 16, 1], strides = [1, 1, 1]} : vector<1x16x75xf32> to vector<1x16x1xf32>
    %13 = vector.extract_strided_slice %0 {offsets = [0, 0, 51], sizes = [1, 16, 1], strides = [1, 1, 1]} : vector<1x16x75xf32> to vector<1x16x1xf32>
    %14 = vector.extract_strided_slice %0 {offsets = [0, 0, 57], sizes = [1, 16, 1], strides = [1, 1, 1]} : vector<1x16x75xf32> to vector<1x16x1xf32>
    %15 = vector.extract_strided_slice %0 {offsets = [0, 0, 60], sizes = [1, 16, 1], strides = [1, 1, 1]} : vector<1x16x75xf32> to vector<1x16x1xf32>
    %16 = vector.extract_strided_slice %0 {offsets = [0, 0, 63], sizes = [1, 16, 1], strides = [1, 1, 1]} : vector<1x16x75xf32> to vector<1x16x1xf32>
    %17 = vector.extract_strided_slice %0 {offsets = [0, 0, 69], sizes = [1, 16, 1], strides = [1, 1, 1]} : vector<1x16x75xf32> to vector<1x16x1xf32>
    %18 = vector.extract_strided_slice %0 {offsets = [0, 0, 4], sizes = [1, 16, 1], strides = [1, 1, 1]} : vector<1x16x75xf32> to vector<1x16x1xf32>
    %19 = vector.extract_strided_slice %0 {offsets = [0, 0, 10], sizes = [1, 16, 1], strides = [1, 1, 1]} : vector<1x16x75xf32> to vector<1x16x1xf32>
    %20 = vector.extract_strided_slice %0 {offsets = [0, 0, 13], sizes = [1, 16, 1], strides = [1, 1, 1]} : vector<1x16x75xf32> to vector<1x16x1xf32>
    %21 = vector.extract_strided_slice %0 {offsets = [0, 0, 16], sizes = [1, 16, 1], strides = [1, 1, 1]} : vector<1x16x75xf32> to vector<1x16x1xf32>
    %22 = vector.extract_strided_slice %0 {offsets = [0, 0, 19], sizes = [1, 16, 1], strides = [1, 1, 1]} : vector<1x16x75xf32> to vector<1x16x1xf32>
    %23 = vector.extract_strided_slice %0 {offsets = [0, 0, 25], sizes = [1, 16, 1], strides = [1, 1, 1]} : vector<1x16x75xf32> to vector<1x16x1xf32>
    %24 = vector.extract_strided_slice %0 {offsets = [0, 0, 28], sizes = [1, 16, 1], strides = [1, 1, 1]} : vector<1x16x75xf32> to vector<1x16x1xf32>
    %25 = vector.extract_strided_slice %0 {offsets = [0, 0, 31], sizes = [1, 16, 1], strides = [1, 1, 1]} : vector<1x16x75xf32> to vector<1x16x1xf32>
    %26 = vector.extract_strided_slice %0 {offsets = [0, 0, 37], sizes = [1, 16, 1], strides = [1, 1, 1]} : vector<1x16x75xf32> to vector<1x16x1xf32>
    %27 = vector.extract_strided_slice %0 {offsets = [0, 0, 40], sizes = [1, 16, 1], strides = [1, 1, 1]} : vector<1x16x75xf32> to vector<1x16x1xf32>
    %28 = vector.extract_strided_slice %0 {offsets = [0, 0, 46], sizes = [1, 16, 1], strides = [1, 1, 1]} : vector<1x16x75xf32> to vector<1x16x1xf32>
    %29 = vector.extract_strided_slice %0 {offsets = [0, 0, 49], sizes = [1, 16, 1], strides = [1, 1, 1]} : vector<1x16x75xf32> to vector<1x16x1xf32>
    %30 = vector.extract_strided_slice %0 {offsets = [0, 0, 52], sizes = [1, 16, 1], strides = [1, 1, 1]} : vector<1x16x75xf32> to vector<1x16x1xf32>
    %31 = vector.extract_strided_slice %0 {offsets = [0, 0, 58], sizes = [1, 16, 1], strides = [1, 1, 1]} : vector<1x16x75xf32> to vector<1x16x1xf32>
    %32 = vector.extract_strided_slice %0 {offsets = [0, 0, 61], sizes = [1, 16, 1], strides = [1, 1, 1]} : vector<1x16x75xf32> to vector<1x16x1xf32>
    %33 = vector.extract_strided_slice %0 {offsets = [0, 0, 64], sizes = [1, 16, 1], strides = [1, 1, 1]} : vector<1x16x75xf32> to vector<1x16x1xf32>
    %34 = vector.extract_strided_slice %0 {offsets = [0, 0, 70], sizes = [1, 16, 1], strides = [1, 1, 1]} : vector<1x16x75xf32> to vector<1x16x1xf32>
    %35 = vector.extract_strided_slice %0 {offsets = [0, 0, 5], sizes = [1, 16, 1], strides = [1, 1, 1]} : vector<1x16x75xf32> to vector<1x16x1xf32>
    %36 = vector.extract_strided_slice %0 {offsets = [0, 0, 11], sizes = [1, 16, 1], strides = [1, 1, 1]} : vector<1x16x75xf32> to vector<1x16x1xf32>
    %37 = vector.extract_strided_slice %0 {offsets = [0, 0, 14], sizes = [1, 16, 1], strides = [1, 1, 1]} : vector<1x16x75xf32> to vector<1x16x1xf32>
    %38 = vector.extract_strided_slice %0 {offsets = [0, 0, 17], sizes = [1, 16, 1], strides = [1, 1, 1]} : vector<1x16x75xf32> to vector<1x16x1xf32>
    %39 = vector.extract_strided_slice %0 {offsets = [0, 0, 20], sizes = [1, 16, 1], strides = [1, 1, 1]} : vector<1x16x75xf32> to vector<1x16x1xf32>
    %40 = vector.extract_strided_slice %0 {offsets = [0, 0, 26], sizes = [1, 16, 1], strides = [1, 1, 1]} : vector<1x16x75xf32> to vector<1x16x1xf32>
    %41 = vector.extract_strided_slice %0 {offsets = [0, 0, 29], sizes = [1, 16, 1], strides = [1, 1, 1]} : vector<1x16x75xf32> to vector<1x16x1xf32>
    %42 = vector.extract_strided_slice %0 {offsets = [0, 0, 32], sizes = [1, 16, 1], strides = [1, 1, 1]} : vector<1x16x75xf32> to vector<1x16x1xf32>
    %43 = vector.extract_strided_slice %0 {offsets = [0, 0, 38], sizes = [1, 16, 1], strides = [1, 1, 1]} : vector<1x16x75xf32> to vector<1x16x1xf32>
    %44 = vector.extract_strided_slice %0 {offsets = [0, 0, 41], sizes = [1, 16, 1], strides = [1, 1, 1]} : vector<1x16x75xf32> to vector<1x16x1xf32>
    %45 = vector.extract_strided_slice %0 {offsets = [0, 0, 47], sizes = [1, 16, 1], strides = [1, 1, 1]} : vector<1x16x75xf32> to vector<1x16x1xf32>
    %46 = vector.extract_strided_slice %0 {offsets = [0, 0, 50], sizes = [1, 16, 1], strides = [1, 1, 1]} : vector<1x16x75xf32> to vector<1x16x1xf32>
    %47 = vector.extract_strided_slice %0 {offsets = [0, 0, 53], sizes = [1, 16, 1], strides = [1, 1, 1]} : vector<1x16x75xf32> to vector<1x16x1xf32>
    %48 = vector.extract_strided_slice %0 {offsets = [0, 0, 59], sizes = [1, 16, 1], strides = [1, 1, 1]} : vector<1x16x75xf32> to vector<1x16x1xf32>
    %49 = vector.extract_strided_slice %0 {offsets = [0, 0, 62], sizes = [1, 16, 1], strides = [1, 1, 1]} : vector<1x16x75xf32> to vector<1x16x1xf32>
    %50 = vector.extract_strided_slice %0 {offsets = [0, 0, 65], sizes = [1, 16, 1], strides = [1, 1, 1]} : vector<1x16x75xf32> to vector<1x16x1xf32>
    %51 = vector.extract_strided_slice %0 {offsets = [0, 0, 71], sizes = [1, 16, 1], strides = [1, 1, 1]} : vector<1x16x75xf32> to vector<1x16x1xf32>
    %52 = tpu.concatenate %1, %2, %3, %4, %5, %6, %7, %8, %9, %10, %11, %12, %13, %14, %15, %16 in 2 : vector<1x16x1xf32>, vector<1x16x1xf32>, vector<1x16x1xf32>, vector<1x16x1xf32>, vector<1x16x1xf32>, vector<1x16x1xf32>, vector<1x16x1xf32>, vector<1x16x1xf32>, vector<1x16x1xf32>, vector<1x16x1xf32>, vector<1x16x1xf32>, vector<1x16x1xf32>, vector<1x16x1xf32>, vector<1x16x1xf32>, vector<1x16x1xf32>, vector<1x16x1xf32> -> vector<1x16x16xf32>
    %53 = tpu.concatenate %17, %18, %19, %20, %21, %22, %23, %24, %25, %26, %27, %28, %29, %30, %31, %32 in 2 : vector<1x16x1xf32>, vector<1x16x1xf32>, vector<1x16x1xf32>, vector<1x16x1xf32>, vector<1x16x1xf32>, vector<1x16x1xf32>, vector<1x16x1xf32>, vector<1x16x1xf32>, vector<1x16x1xf32>, vector<1x16x1xf32>, vector<1x16x1xf32>, vector<1x16x1xf32>, vector<1x16x1xf32>, vector<1x16x1xf32>, vector<1x16x1xf32>, vector<1x16x1xf32> -> vector<1x16x16xf32>
    %54 = tpu.concatenate %33, %34, %35, %36, %37, %38, %39, %40, %41, %42, %43, %44, %45, %46, %47, %48 in 2 : vector<1x16x1xf32>, vector<1x16x1xf32>, vector<1x16x1xf32>, vector<1x16x1xf32>, vector<1x16x1xf32>, vector<1x16x1xf32>, vector<1x16x1xf32>, vector<1x16x1xf32>, vector<1x16x1xf32>, vector<1x16x1xf32>, vector<1x16x1xf32>, vector<1x16x1xf32>, vector<1x16x1xf32>, vector<1x16x1xf32>, vector<1x16x1xf32>, vector<1x16x1xf32> -> vector<1x16x16xf32>
    %55 = tpu.concatenate %49, %50, %51 in 2 : vector<1x16x1xf32>, vector<1x16x1xf32>, vector<1x16x1xf32> -> vector<1x16x3xf32>
    %56 = tpu.concatenate %52, %53, %54, %55 in 2 : vector<1x16x16xf32>, vector<1x16x16xf32>, vector<1x16x16xf32>, vector<1x16x3xf32> -> vector<1x16x51xf32>
    %57 = tpu.transpose %56, [0, 2, 1] : vector<1x16x51xf32> -> vector<1x51x16xf32>
    %58 = vector.extract_strided_slice %57 {offsets = [0, 0, 0], sizes = [1, 17, 16], strides = [1, 1, 1]} : vector<1x51x16xf32> to vector<1x17x16xf32>
    %59 = vector.extract_strided_slice %58 {offsets = [0, 0, 0], sizes = [1, 17, 1], strides = [1, 1, 1]} : vector<1x17x16xf32> to vector<1x17x1xf32>
    %60 = vector.extract_strided_slice %58 {offsets = [0, 0, 0], sizes = [1, 17, 15], strides = [1, 1, 1]} : vector<1x17x16xf32> to vector<1x17x15xf32>
    %61 = tpu.concatenate %59, %60 in 2 : vector<1x17x1xf32>, vector<1x17x15xf32> -> vector<1x17x16xf32>
    %c0_2 = arith.constant 0 : index
    %c0_3 = arith.constant 0 : index
    %c0_4 = arith.constant 0 : index
    %c0_5 = arith.constant 0 : index
    %62 = vector.load %arg2[%c0_2, %c0_3, %c0_4, %c0_5] : memref<1x3x17x16xf32, #tpu.memory_space<vmem>>, vector<1x1x17x16xf32>
    %63 = vector.shape_cast %62 : vector<1x1x17x16xf32> to vector<1x17x16xf32>
    %64 = vector.shape_cast %58 : vector<1x17x16xf32> to vector<1x1x17x16xf32>
    tpu.vector_store %arg2[%c0_2, %c0_3, %c0_4, %c0_5], %64 {strides = array<i32>} : memref<1x3x17x16xf32, #tpu.memory_space<vmem>>, vector<1x1x17x16xf32>,
    %65 = arith.subf %58, %61 : vector<1x17x16xf32>
    %c0_6 = arith.constant 0 : index
    %c0_7 = arith.constant 0 : index
    %c0_8 = arith.constant 0 : index
    %c0_9 = arith.constant 0 : index
    %66 = vector.load %arg3[%c0_6, %c0_7, %c0_8, %c0_9] : memref<1x3x17x16xf32, #tpu.memory_space<vmem>>, vector<1x1x17x16xf32>
    %67 = vector.shape_cast %66 : vector<1x1x17x16xf32> to vector<1x17x16xf32>
    %68 = vector.shape_cast %65 : vector<1x17x16xf32> to vector<1x1x17x16xf32>
    tpu.vector_store %arg3[%c0_6, %c0_7, %c0_8, %c0_9], %68 {strides = array<i32>} : memref<1x3x17x16xf32, #tpu.memory_space<vmem>>, vector<1x1x17x16xf32>,
    %69 = vector.extract_strided_slice %57 {offsets = [0, 17, 0], sizes = [1, 17, 16], strides = [1, 1, 1]} : vector<1x51x16xf32> to vector<1x17x16xf32>
    %70 = vector.extract_strided_slice %69 {offsets = [0, 0, 0], sizes = [1, 17, 1], strides = [1, 1, 1]} : vector<1x17x16xf32> to vector<1x17x1xf32>
    %71 = vector.extract_strided_slice %69 {offsets = [0, 0, 0], sizes = [1, 17, 15], strides = [1, 1, 1]} : vector<1x17x16xf32> to vector<1x17x15xf32>
    %72 = tpu.concatenate %70, %71 in 2 : vector<1x17x1xf32>, vector<1x17x15xf32> -> vector<1x17x16xf32>
    %c0_10 = arith.constant 0 : index
    %c1 = arith.constant 1 : index
    %c0_11 = arith.constant 0 : index
    %c0_12 = arith.constant 0 : index
    %73 = vector.load %arg2[%c0_10, %c1, %c0_11, %c0_12] : memref<1x3x17x16xf32, #tpu.memory_space<vmem>>, vector<1x1x17x16xf32>
    %74 = vector.shape_cast %73 : vector<1x1x17x16xf32> to vector<1x17x16xf32>
    %75 = vector.shape_cast %69 : vector<1x17x16xf32> to vector<1x1x17x16xf32>
    tpu.vector_store %arg2[%c0_10, %c1, %c0_11, %c0_12], %75 {strides = array<i32>} : memref<1x3x17x16xf32, #tpu.memory_space<vmem>>, vector<1x1x17x16xf32>,
    %76 = arith.subf %69, %72 : vector<1x17x16xf32>
    %c0_13 = arith.constant 0 : index
    %c1_14 = arith.constant 1 : index
    %c0_15 = arith.constant 0 : index
    %c0_16 = arith.constant 0 : index
    %77 = vector.load %arg3[%c0_13, %c1_14, %c0_15, %c0_16] : memref<1x3x17x16xf32, #tpu.memory_space<vmem>>, vector<1x1x17x16xf32>
    %78 = vector.shape_cast %77 : vector<1x1x17x16xf32> to vector<1x17x16xf32>
    %79 = vector.shape_cast %76 : vector<1x17x16xf32> to vector<1x1x17x16xf32>
    tpu.vector_store %arg3[%c0_13, %c1_14, %c0_15, %c0_16], %79 {strides = array<i32>} : memref<1x3x17x16xf32, #tpu.memory_space<vmem>>, vector<1x1x17x16xf32>,
    %80 = vector.extract_strided_slice %57 {offsets = [0, 34, 0], sizes = [1, 17, 16], strides = [1, 1, 1]} : vector<1x51x16xf32> to vector<1x17x16xf32>
    %81 = vector.extract_strided_slice %80 {offsets = [0, 0, 0], sizes = [1, 17, 1], strides = [1, 1, 1]} : vector<1x17x16xf32> to vector<1x17x1xf32>
    %82 = vector.extract_strided_slice %80 {offsets = [0, 0, 0], sizes = [1, 17, 15], strides = [1, 1, 1]} : vector<1x17x16xf32> to vector<1x17x15xf32>
    %83 = tpu.concatenate %81, %82 in 2 : vector<1x17x1xf32>, vector<1x17x15xf32> -> vector<1x17x16xf32>
    %c0_17 = arith.constant 0 : index
    %c2 = arith.constant 2 : index
    %c0_18 = arith.constant 0 : index
    %c0_19 = arith.constant 0 : index
    %84 = vector.load %arg2[%c0_17, %c2, %c0_18, %c0_19] : memref<1x3x17x16xf32, #tpu.memory_space<vmem>>, vector<1x1x17x16xf32>
    %85 = vector.shape_cast %84 : vector<1x1x17x16xf32> to vector<1x17x16xf32>
    %86 = vector.shape_cast %80 : vector<1x17x16xf32> to vector<1x1x17x16xf32>
    tpu.vector_store %arg2[%c0_17, %c2, %c0_18, %c0_19], %86 {strides = array<i32>} : memref<1x3x17x16xf32, #tpu.memory_space<vmem>>, vector<1x1x17x16xf32>,
    %87 = arith.subf %80, %83 : vector<1x17x16xf32>
    %c0_20 = arith.constant 0 : index
    %c2_21 = arith.constant 2 : index
    %c0_22 = arith.constant 0 : index
    %c0_23 = arith.constant 0 : index
    %88 = vector.load %arg3[%c0_20, %c2_21, %c0_22, %c0_23] : memref<1x3x17x16xf32, #tpu.memory_space<vmem>>, vector<1x1x17x16xf32>
    %89 = vector.shape_cast %88 : vector<1x1x17x16xf32> to vector<1x17x16xf32>
    %90 = vector.shape_cast %87 : vector<1x17x16xf32> to vector<1x1x17x16xf32>
    tpu.vector_store %arg3[%c0_20, %c2_21, %c0_22, %c0_23], %90 {strides = array<i32>} : memref<1x3x17x16xf32, #tpu.memory_space<vmem>>, vector<1x1x17x16xf32>,
    return
  }
  func.func @transform_0(%arg0: i32) -> (i32, i32, i32) {
    %c0_i32 = arith.constant 0 : i32
    %c0_i32_0 = arith.constant 0 : i32
    %c0_i32_1 = arith.constant 0 : i32
    return %arg0, %c0_i32, %c0_i32_0 : i32, i32, i32
  }
  func.func @transform_1(%arg0: i32) -> (i32, i32, i32, i32) {
    %c0_i32 = arith.constant 0 : i32
    %c0_i32_0 = arith.constant 0 : i32
    %c0_i32_1 = arith.constant 0 : i32
    %c0_i32_2 = arith.constant 0 : i32
    return %arg0, %c0_i32, %c0_i32_0, %c0_i32_1 : i32, i32, i32, i32
  }
  func.func @transform_2(%arg0: i32) -> (i32, i32, i32, i32) {
    %c0_i32 = arith.constant 0 : i32
    %c0_i32_0 = arith.constant 0 : i32
    %c0_i32_1 = arith.constant 0 : i32
    %c0_i32_2 = arith.constant 0 : i32
    return %arg0, %c0_i32, %c0_i32_0, %c0_i32_1 : i32, i32, i32, i32
  }
}

</mosaic_0001>

<llo_original>
// kernel: tpu_custom_call.1
$region0: #{tpu_custom_call.1}
  #allocation0 [shape = 'u32[]', space=smem, size = 0x4, offset = 0x4, fixed_abs, tag = 'smem constant byte address 0x4 - core index']
  #allocation1 [shape = 'u32[72,128]{1,0:T(1,128)}', space=vmem, size = 0x9000, scoped, tag = 'internal scratch']
  %s0 = inlined_call_operand.hbm [shape: f32[2,16,75], index: 0, kind: input, shape index: {}]
  %s1 = inlined_call_operand.vmem [shape: f32[2,3,17,16], index: 1, kind: output, shape index: {0}]
  %s2 = inlined_call_operand.vmem [shape: f32[2,3,17,16], index: 2, kind: output, shape index: {1}]
  %3 = xla_tuple %s1, %s2
  %s4 = sld [smem:[#allocation0]]
  $region49: #{tpu_custom_call.1} parent=0
    _
  %s6 = ssub.s32 1, %s4
  %s7 = scalar_select 0, %s6, %s4
  $region1: #{tpu_custom_call.1} parent=0
    #allocation2 [shape = 'u8[16384]{0}', space=vmem, size = 0x4000, scoped, tag = 'input window, operand 0']
    #allocation3 [shape = 's32[2]{0}', space=sflag, size = 0x8, scoped, tag = 'scoped memory for tpu_custom_call.1']
    %8 = vsyncpa [#allocation3], 0
    %s9 = scalar_lea.sflag [#allocation3], 1
    %10 = vsyncpa %s9, 0
    loop: start=0, step=1, limit=4
    $region2: #{tpu_custom_call.1} parent=1 // loop_pre_header
      _
    $region3: #{tpu_custom_call.1} parent=1 // loop_header
      %s12 = sphi 0, %s16
      %p13 = scmp.ge.s32.totalorder %s12, 4
      %s22 = sphi 0, %s24
      %s25 = sphi 0, %s22
      %s26 = sphi 0, %s25
      %s42 = sphi 0, %s26
      %s48 = sphi 0, %s50
      %s51 = sphi 0, %s48
      %s52 = sphi 0, %s51
      %s68 = sphi 0, %s52
      %s74 = sphi 0, %s76
      %s77 = sphi 0, %s74
      %s78 = sphi 0, %s77
      %s94 = sphi 0, %s78
    $region4: #{tpu_custom_call.1} parent=1 // loop_header_branch
      %15 = sbr.rel (%p13) target = $region8
    $region5: #{tpu_custom_call.1} parent=1 // loop_body
      %s17 = ssub.s32 %s12, 1
      %s18 = ssub.s32 %s12, 2
      %s19 = sadd.s32 %s12, 1
      %s20 = ssub.s32 %s12, %s19
      %p21 = scmp.eq.s32.totalorder %s20, 0
      %s23 = sadd.s32 %s22, 1
      %s24 = scalar_select %p21, %s22, %s23
      %p27 = pneg %p21
      %p28 = scmp.eq.s32.totalorder %s12, 1
      %p29 = por %p27, %p28
      %p30 = scmp.ne.s32.totalorder %s22, %s25
      %p31 = scmp.eq.s32.totalorder %s12, 0
      %p32 = por %p30, %p31
      %p33 = scmp.ne.s32.totalorder %s22, %s25
      %p34 = scmp.eq.s32.totalorder %s17, 1
      %p35 = por %p33, %p34
      %p36 = scmp.ne.s32.totalorder %s25, %s26
      %p37 = scmp.eq.s32.totalorder %s17, 0
      %p38 = por %p36, %p37
      %p39 = scmp.ne.s32.totalorder %s25, %s26
      %p40 = scmp.eq.s32.totalorder %s18, 1
      %p41 = por %p39, %p40
      %p43 = scmp.ne.s32.totalorder %s26, %s42
      %p44 = scmp.eq.s32.totalorder %s18, 0
      %p45 = por %p43, %p44
      %s46 = ssub.s32 %s12, %s19
      %p47 = scmp.eq.s32.totalorder %s46, 0
      %s49 = sadd.s32 %s48, 1
      %s50 = scalar_select %p47, %s48, %s49
      %p53 = pneg %p47
      %p54 = scmp.eq.s32.totalorder %s12, 1
      %p55 = por %p53, %p54
      %p56 = scmp.ne.s32.totalorder %s48, %s51
      %p57 = scmp.eq.s32.totalorder %s12, 0
      %p58 = por %p56, %p57
      %p59 = scmp.ne.s32.totalorder %s48, %s51
      %p60 = scmp.eq.s32.totalorder %s17, 1
      %p61 = por %p59, %p60
      %p62 = scmp.ne.s32.totalorder %s51, %s52
      %p63 = scmp.eq.s32.totalorder %s17, 0
      %p64 = por %p62, %p63
      %p65 = scmp.ne.s32.totalorder %s51, %s52
      %p66 = scmp.eq.s32.totalorder %s18, 1
      %p67 = por %p65, %p66
      %p69 = scmp.ne.s32.totalorder %s52, %s68
      %p70 = scmp.eq.s32.totalorder %s18, 0
      %p71 = por %p69, %p70
      %s72 = ssub.s32 %s12, %s19
      %p73 = scmp.eq.s32.totalorder %s72, 0
      %s75 = sadd.s32 %s74, 1
      %s76 = scalar_select %p73, %s74, %s75
      %p79 = pneg %p73
      %p80 = scmp.eq.s32.totalorder %s12, 1
      %p81 = por %p79, %p80
      %p82 = scmp.ne.s32.totalorder %s74, %s77
      %p83 = scmp.eq.s32.totalorder %s12, 0
      %p84 = por %p82, %p83
      %p85 = scmp.ne.s32.totalorder %s74, %s77
      %p86 = scmp.eq.s32.totalorder %s17, 1
      %p87 = por %p85, %p86
      %p88 = scmp.ne.s32.totalorder %s77, %s78
      %p89 = scmp.eq.s32.totalorder %s17, 0
      %p90 = por %p88, %p89
      %p91 = scmp.ne.s32.totalorder %s77, %s78
      %p92 = scmp.eq.s32.totalorder %s18, 1
      %p93 = por %p91, %p92
      %p95 = scmp.ne.s32.totalorder %s78, %s94
      %p96 = scmp.eq.s32.totalorder %s18, 0
      %p97 = por %p95, %p96
      %p98 = scmp.le.s32.totalorder 1, %s12
      %p99 = scmp.lt.s32.totalorder %s12, 3
      %p100 = pnand %p98, %p99
      %p101 = pneg %p100
      // Predicated region
      $region9: #{tpu_custom_call.1} parent=5 // pred_check
        _
      $region10: #{tpu_custom_call.1} parent=5 // pred_check_branch
        %103 = sbr.rel (%p100) target = $region12
      $region11: #{tpu_custom_call.1} parent=5 // pred_region
        %s104 = ssub.s32 %s12, 1
      $region12: #{tpu_custom_call.1} parent=5 // pred_fallthru
        _
      %p105 = scmp.lt.s32.totalorder %s12, 2
      // Predicated region
      $region13: #{tpu_custom_call.1} parent=5 // pred_check
        %p106 = pneg %p105
      $region14: #{tpu_custom_call.1} parent=5 // pred_check_branch
        %108 = sbr.rel (%p106) target = $region16
      $region15: #{tpu_custom_call.1} parent=5 // pred_region
        // Predicated region
        $region17: #{tpu_custom_call.1} parent=15 // pred_check
          %p109 = pneg %p32
        $region18: #{tpu_custom_call.1} parent=15 // pred_check_branch
          %111 = sbr.rel (%p109) target = $region20
        $region19: #{tpu_custom_call.1} parent=15 // pred_region
          %s112 = sand.u32 %s22, 1
          %s113 = scalar_lea.sflag [#allocation3], %s112
          %s114 = sand.u32 %s22, 1
          %s115 = smul.addr %s114, 16
          %s116 = scalar_lea.vmem [#allocation2], %s115
          %118 = vsyncadd %s113, 0
          %s119 = smul.addr %s12, 2
          %s120 = smul.addr %s119, 8
          %s121 = scalar_lea.hbm %s0, %s120
          %s122 = sshll.u32 %s121, 4
          %s123 = int_to_ptr.hbm [resolvable:$true] %s122
          %s124 = sshll.u32 %s116, 4
          %s125 = int_to_ptr.vmem [resolvable:$true] %s124
          %130 = dma.hbm_to_vmem [thread:$0]  %s123, 256, %s125, %s113, 128, 128, 8
        $region20: #{tpu_custom_call.1} parent=15 // pred_fallthru
          _
      $region16: #{tpu_custom_call.1} parent=5 // pred_fallthru
        _
      %p131 = scmp.le.s32.totalorder 1, %s12
      %p132 = scmp.lt.s32.totalorder %s12, 3
      %p133 = pnand %p131, %p132
      %p134 = pneg %p133
      // Predicated region
      $region21: #{tpu_custom_call.1} parent=5 // pred_check
        _
      $region22: #{tpu_custom_call.1} parent=5 // pred_check_branch
        %136 = sbr.rel (%p133) target = $region24
      $region23: #{tpu_custom_call.1} parent=5 // pred_region
        %s137 = ssub.s32 %s12, 1
        %s138 = sand.u32 %s25, 1
        %s139 = scalar_lea.sflag [#allocation3], %s138
        %s140 = sand.u32 %s25, 1
        %s141 = smul.addr %s140, 16
        %s142 = scalar_lea.vmem [#allocation2], %s141
        // Predicated region
        $region25: #{tpu_custom_call.1} parent=23 // pred_check
          %p143 = pneg %p38
        $region26: #{tpu_custom_call.1} parent=23 // pred_check_branch
          %145 = sbr.rel (%p143) target = $region28
        $region27: #{tpu_custom_call.1} parent=23 // pred_region
          %147 = dma.done %s139, 256
        $region28: #{tpu_custom_call.1} parent=23 // pred_fallthru
          _
        %s148 = sand.u32 %s25, 1
        %s149 = scalar_lea.sflag [#allocation3], %s148
        %s150 = sand.u32 %s25, 1
        %s151 = smul.addr %s150, 16
        %s152 = scalar_lea.vmem [#allocation2], %s151
        %p153 = pneg %p38
        %p154 = pneg %p35
        %p155 = pneg %p64
        %p156 = pneg %p61
        %p157 = scmp.lt.s32.totalorder %s17, 1
        %s158 = scalar_select %p157, %s17, 1
        %s159 = smul.addr %s158, 9
        %s160 = smul.addr %s159, 8
        %s161 = scalar_lea.vmem %s1, %s160
        %p162 = pneg %p90
        %p163 = pneg %p87
        %p164 = scmp.lt.s32.totalorder %s17, 1
        %s165 = scalar_select %p164, %s17, 1
        %s166 = smul.addr %s165, 9
        %s167 = smul.addr %s166, 8
        %s168 = scalar_lea.vmem %s2, %s167
        %p169 = scmp.lt.s32.totalorder %s17, 1
        %s170 = scalar_select %p169, %s17, 1
        %s171 = smul.addr %s170, 9
        %s172 = smul.addr %s171, 8
        %s173 = scalar_lea.vmem %s1, %s172
        %p174 = scmp.lt.s32.totalorder %s17, 1
        %s175 = scalar_select %p174, %s17, 1
        %s176 = smul.addr %s175, 9
        %s177 = smul.addr %s176, 8
        %s178 = scalar_lea.vmem %s2, %s177
        %v179 = vld [vmem:[%s142] sm:$0xff]
        %v180 = vld [vmem:[%s142 + $0x8] sm:$0xff]
        %183 = vrot.lane.b32.xlu0 %v179, 125
        %v184 = vpop.permute.xlu0 %183
        %185 = vrot.lane.b32.xlu0 %v180, 125
        %v186 = vpop.permute.xlu0 %185
        %189 = vrot.lane.b32.xlu0 %v179, 120
        %v190 = vpop.permute.xlu0 %189
        %191 = vrot.lane.b32.xlu0 %v180, 120
        %v192 = vpop.permute.xlu0 %191
        %195 = vrot.lane.b32.xlu0 %v179, 118
        %v196 = vpop.permute.xlu0 %195
        %197 = vrot.lane.b32.xlu0 %v180, 118
        %v198 = vpop.permute.xlu0 %197
        %201 = vrot.lane.b32.xlu0 %v179, 116
        %v202 = vpop.permute.xlu0 %201
        %203 = vrot.lane.b32.xlu0 %v180, 116
        %v204 = vpop.permute.xlu0 %203
        %207 = vrot.lane.b32.xlu0 %v179, 114
        %v208 = vpop.permute.xlu0 %207
        %209 = vrot.lane.b32.xlu0 %v180, 114
        %v210 = vpop.permute.xlu0 %209
        %213 = vrot.lane.b32.xlu0 %v179, 109
        %v214 = vpop.permute.xlu0 %213
        %215 = vrot.lane.b32.xlu0 %v180, 109
        %v216 = vpop.permute.xlu0 %215
        %219 = vrot.lane.b32.xlu0 %v179, 107
        %v220 = vpop.permute.xlu0 %219
        %221 = vrot.lane.b32.xlu0 %v180, 107
        %v222 = vpop.permute.xlu0 %221
        %225 = vrot.lane.b32.xlu0 %v179, 105
        %v226 = vpop.permute.xlu0 %225
        %227 = vrot.lane.b32.xlu0 %v180, 105
        %v228 = vpop.permute.xlu0 %227
        %231 = vrot.lane.b32.xlu0 %v179, 100
        %v232 = vpop.permute.xlu0 %231
        %233 = vrot.lane.b32.xlu0 %v180, 100
        %v234 = vpop.permute.xlu0 %233
        %237 = vrot.lane.b32.xlu0 %v179, 98
        %v238 = vpop.permute.xlu0 %237
        %239 = vrot.lane.b32.xlu0 %v180, 98
        %v240 = vpop.permute.xlu0 %239
        %243 = vrot.lane.b32.xlu0 %v179, 93
        %v244 = vpop.permute.xlu0 %243
        %245 = vrot.lane.b32.xlu0 %v180, 93
        %v246 = vpop.permute.xlu0 %245
        %249 = vrot.lane.b32.xlu0 %v179, 91
        %v250 = vpop.permute.xlu0 %249
        %251 = vrot.lane.b32.xlu0 %v180, 91
        %v252 = vpop.permute.xlu0 %251
        %255 = vrot.lane.b32.xlu0 %v179, 89
        %v256 = vpop.permute.xlu0 %255
        %257 = vrot.lane.b32.xlu0 %v180, 89
        %v258 = vpop.permute.xlu0 %257
        %261 = vrot.lane.b32.xlu0 %v179, 84
        %v262 = vpop.permute.xlu0 %261
        %263 = vrot.lane.b32.xlu0 %v180, 84
        %v264 = vpop.permute.xlu0 %263
        %267 = vrot.lane.b32.xlu0 %v179, 82
        %v268 = vpop.permute.xlu0 %267
        %269 = vrot.lane.b32.xlu0 %v180, 82
        %v270 = vpop.permute.xlu0 %269
        %273 = vrot.lane.b32.xlu0 %v179, 80
        %v274 = vpop.permute.xlu0 %273
        %275 = vrot.lane.b32.xlu0 %v180, 80
        %v276 = vpop.permute.xlu0 %275
        %vm279 = vcmask 7168
        %v280 = vsel %vm279, %v184, %v190
        %v281 = vsel %vm279, %v186, %v192
        %vm282 = vcmask 15360
        %v283 = vsel %vm282, %v280, %v196
        %v284 = vsel %vm282, %v281, %v198
        %vm285 = vcmask 23552
        %v286 = vsel %vm285, %v283, %v202
        %v287 = vsel %vm285, %v284, %v204
        %vm288 = vcmask 31744
        %v289 = vsel %vm288, %v286, %v208
        %v290 = vsel %vm288, %v287, %v210
        %vm291 = vcmask 39936
        %v292 = vsel %vm291, %v289, %v214
        %v293 = vsel %vm291, %v290, %v216
        %vm294 = vcmask 48128
        %v295 = vsel %vm294, %v292, %v220
        %v296 = vsel %vm294, %v293, %v222
        %vm297 = vcmask 56320
        %v298 = vsel %vm297, %v295, %v226
        %v299 = vsel %vm297, %v296, %v228
        %vm300 = vcmask 64512
        %v301 = vsel %vm300, %v298, %v232
        %v302 = vsel %vm300, %v299, %v234
        %vm303 = vcmask 72704
        %v304 = vsel %vm303, %v301, %v238
        %v305 = vsel %vm303, %v302, %v240
        %vm306 = vcmask 80896
        %v307 = vsel %vm306, %v304, %v244
        %v308 = vsel %vm306, %v305, %v246
        %vm309 = vcmask 89088
        %v310 = vsel %vm309, %v307, %v250
        %v311 = vsel %vm309, %v308, %v252
        %vm312 = vcmask 97280
        %v313 = vsel %vm312, %v310, %v256
        %v314 = vsel %vm312, %v311, %v258
        %vm315 = vcmask 105472
        %v316 = vsel %vm315, %v313, %v262
        %v317 = vsel %vm315, %v314, %v264
        %vm318 = vcmask 113664
        %v319 = vsel %vm318, %v316, %v268
        %v320 = vsel %vm318, %v317, %v270
        %vm321 = vcmask 121856
        %v322 = vsel %vm321, %v319, %v274
        %v323 = vsel %vm321, %v320, %v276
        %324 = vrot.lane.b32.xlu0 %v179, 59
        %v325 = vpop.permute.xlu0 %324
        %326 = vrot.lane.b32.xlu0 %v180, 59
        %v327 = vpop.permute.xlu0 %326
        %v330 = vsel %vm279, %v325, %v184
        %v331 = vsel %vm279, %v327, %v186
        %v332 = vsel %vm282, %v330, %v190
        %v333 = vsel %vm282, %v331, %v192
        %v334 = vsel %vm285, %v332, %v196
        %v335 = vsel %vm285, %v333, %v198
        %v336 = vsel %vm288, %v334, %v202
        %v337 = vsel %vm288, %v335, %v204
        %v338 = vsel %vm291, %v336, %v208
        %v339 = vsel %vm291, %v337, %v210
        %v340 = vsel %vm294, %v338, %v214
        %v341 = vsel %vm294, %v339, %v216
        %v342 = vsel %vm297, %v340, %v220
        %v343 = vsel %vm297, %v341, %v222
        %v344 = vsel %vm300, %v342, %v226
        %v345 = vsel %vm300, %v343, %v228
        %v346 = vsel %vm303, %v344, %v232
        %v347 = vsel %vm303, %v345, %v234
        %v348 = vsel %vm306, %v346, %v238
        %v349 = vsel %vm306, %v347, %v240
        %v350 = vsel %vm309, %v348, %v244
        %v351 = vsel %vm309, %v349, %v246
        %v352 = vsel %vm312, %v350, %v250
        %v353 = vsel %vm312, %v351, %v252
        %v354 = vsel %vm315, %v352, %v256
        %v355 = vsel %vm315, %v353, %v258
        %v356 = vsel %vm318, %v354, %v262
        %v357 = vsel %vm318, %v355, %v264
        %v358 = vsel %vm321, %v356, %v268
        %v359 = vsel %vm321, %v357, %v270
        %360 = vrot.lane.b32.xlu0 %v179, 64
        %v361 = vpop.permute.xlu0 %360
        %362 = vrot.lane.b32.xlu0 %v180, 64
        %v363 = vpop.permute.xlu0 %362
        %v366 = vsel %vm279, %v361, %v325
        %v367 = vsel %vm279, %v363, %v327
        %v368 = vsel %vm282, %v366, %v184
        %v369 = vsel %vm282, %v367, %v186
        %v370 = vsel %vm285, %v368, %v190
        %v371 = vsel %vm285, %v369, %v192
        %v372 = vsel %vm288, %v370, %v196
        %v373 = vsel %vm288, %v371, %v198
        %v374 = vsel %vm291, %v372, %v202
        %v375 = vsel %vm291, %v373, %v204
        %v376 = vsel %vm294, %v374, %v208
        %v377 = vsel %vm294, %v375, %v210
        %v378 = vsel %vm297, %v376, %v214
        %v379 = vsel %vm297, %v377, %v216
        %v380 = vsel %vm300, %v378, %v220
        %v381 = vsel %vm300, %v379, %v222
        %v382 = vsel %vm303, %v380, %v226
        %v383 = vsel %vm303, %v381, %v228
        %v384 = vsel %vm306, %v382, %v232
        %v385 = vsel %vm306, %v383, %v234
        %v386 = vsel %vm309, %v384, %v238
        %v387 = vsel %vm309, %v385, %v240
        %v388 = vsel %vm312, %v386, %v244
        %v389 = vsel %vm312, %v387, %v246
        %v390 = vsel %vm315, %v388, %v250
        %v391 = vsel %vm315, %v389, %v252
        %v392 = vsel %vm318, %v390, %v256
        %v393 = vsel %vm318, %v391, %v258
        %v394 = vsel %vm321, %v392, %v262
        %v395 = vsel %vm321, %v393, %v264
        %396 = vrot.lane.b32.xlu0 %v179, 66
        %v397 = vpop.permute.xlu0 %396
        %398 = vrot.lane.b32.xlu0 %v180, 66
        %v399 = vpop.permute.xlu0 %398
        %v402 = vsel %vm279, %v397, %v361
        %v403 = vsel %vm279, %v399, %v363
        %v404 = vsel %vm282, %v402, %v325
        %v405 = vsel %vm282, %v403, %v327
        %408 = vrot.lane.b32.xlu0 %v358, 16
        %v409 = vpop.permute.xlu0 %408
        %410 = vrot.lane.b32.xlu0 %v359, 16
        %v411 = vpop.permute.xlu0 %410
        %416 = vrot.lane.b32.xlu0 %v394, 32
        %v417 = vpop.permute.xlu0 %416
        %418 = vrot.lane.b32.xlu0 %v395, 32
        %v419 = vpop.permute.xlu0 %418
        %424 = vrot.lane.b32.xlu0 %v404, 48
        %v425 = vpop.permute.xlu0 %424
        %426 = vrot.lane.b32.xlu0 %v405, 48
        %v427 = vpop.permute.xlu0 %426
        %vm430 = vcmask 130048
        %v431 = vsel %vm430, %v322, %v409
        %v432 = vsel %vm430, %v323, %v411
        %vm433 = vcmask 261120
        %v434 = vsel %vm433, %v431, %v417
        %v435 = vsel %vm433, %v432, %v419
        %vm436 = vcmask 392192
        %v437 = vsel %vm436, %v434, %v425
        %v438 = vsel %vm436, %v435, %v427
        %439 = vxpose.xlu0.b32.start [1/16] %v437, 128
        %440 = vxpose.xlu0.b32.cont [2/16] %v438, 128
        %441 = vxpose.xlu0.b32.cont [3/16] 0.0, 128
        %442 = vxpose.xlu0.b32.cont [4/16] 0.0, 128
        %443 = vxpose.xlu0.b32.cont [5/16] 0.0, 128
        %444 = vxpose.xlu0.b32.cont [6/16] 0.0, 128
        %445 = vxpose.xlu0.b32.cont [7/16] 0.0, 128
        %446 = vxpose.xlu0.b32.cont [8/16] 0.0, 128
        %447 = vxpose.xlu0.b32.cont [9/16] 0.0, 128
        %448 = vxpose.xlu0.b32.cont [10/16] 0.0, 128
        %449 = vxpose.xlu0.b32.cont [11/16] 0.0, 128
        %450 = vxpose.xlu0.b32.cont [12/16] 0.0, 128
        %451 = vxpose.xlu0.b32.cont [13/16] 0.0, 128
        %452 = vxpose.xlu0.b32.cont [14/16] 0.0, 128
        %453 = vxpose.xlu0.b32.cont [15/16] 0.0, 128
        %454 = vxpose.xlu0.b32.end [16/16] 0.0, 128
        %v455 = vpop.trf.xlu0
        %v456 = vpop.trf.xlu0
        %v457 = vpop.trf.xlu0
        %v458 = vpop.trf.xlu0
        %v459 = vpop.trf.xlu0
        %v460 = vpop.trf.xlu0
        %v461 = vpop.trf.xlu0
        %v462 = vpop.trf.xlu0
        %v463 = vpop.trf.xlu0
        %v464 = vpop.trf.xlu0
        %v465 = vpop.trf.xlu0
        %v466 = vpop.trf.xlu0
        %v467 = vpop.trf.xlu0
        %v468 = vpop.trf.xlu0
        %v469 = vpop.trf.xlu0
        %v470 = vpop.trf.xlu0
        %474 = vrot.lane.b32.xlu0 %v455, 1
        %v475 = vpop.permute.xlu0 %474
        %476 = vrot.lane.b32.xlu0 %v456, 1
        %v477 = vpop.permute.xlu0 %476
        %478 = vrot.lane.b32.xlu0 %v457, 1
        %v479 = vpop.permute.xlu0 %478
        %v483 = vsel %vm279, %v455, %v475
        %v484 = vsel %vm279, %v456, %v477
        %v485 = vsel %vm279, %v457, %v479
        %486 = vst.msk [vmem:[%s173] sm:$0xff] %vm430, %v455
        %487 = vst.msk [vmem:[%s173 + $0x8] sm:$0xff] %vm430, %v456
        %vm488 = vcmask 122880
        %489 = vst.msk [vmem:[%s173 + $0x10] sm:$0x1] %vm488, %v457
        %v490 = vsub.f32 %v455, %v483
        %v491 = vsub.f32 %v456, %v484
        %v492 = vsub.f32 %v457, %v485
        %493 = vst.msk [vmem:[%s178] sm:$0xff] %vm430, %v490
        %494 = vst.msk [vmem:[%s178 + $0x8] sm:$0xff] %vm430, %v491
        %495 = vst.msk [vmem:[%s178 + $0x10] sm:$0x1] %vm488, %v492
        %498 = vrot.lane.b32.xlu0 %v458, 1
        %v499 = vpop.permute.xlu0 %498
        %500 = vrot.lane.b32.xlu0 %v459, 1
        %v501 = vpop.permute.xlu0 %500
        %v504 = vsel %vm279, %v458, %v499
        %v505 = vsel %vm279, %v459, %v501
        %s506 = scalar_lea.vmem %s173, 24
        %vm507 = vcmask 130049
        %508 = vst.msk [vmem:[%s506 - $0x1] sm:$0xfe] %vm507, %v457
        %509 = vst.msk [vmem:[%s506 + $0x7] sm:$0xff] %vm430, %v458
        %vm510 = vcmask 123904
        %511 = vst.msk [vmem:[%s506 + $0xf] sm:$0x3] %vm510, %v459
        %v512 = vsub.f32 %v458, %v504
        %v513 = vsub.f32 %v459, %v505
        %s514 = scalar_lea.vmem %s178, 24
        %515 = vst.msk [vmem:[%s514 - $0x1] sm:$0xfe] %vm507, %v492
        %516 = vst.msk [vmem:[%s514 + $0x7] sm:$0xff] %vm430, %v512
        %517 = vst.msk [vmem:[%s514 + $0xf] sm:$0x3] %vm510, %v513
        %520 = vrot.lane.b32.xlu0 %v460, 1
        %v521 = vpop.permute.xlu0 %520
        %522 = vrot.lane.b32.xlu0 %v461, 1
        %v523 = vpop.permute.xlu0 %522
        %v526 = vsel %vm279, %v460, %v521
        %v527 = vsel %vm279, %v461, %v523
        %s528 = scalar_lea.vmem %s173, 48
        %vm529 = vcmask 130050
        %530 = vst.msk [vmem:[%s528 - $0x2] sm:$0xfc] %vm529, %v459
        %531 = vst.msk [vmem:[%s528 + $0x6] sm:$0xff] %vm430, %v460
        %vm532 = vcmask 124928
        %533 = vst.msk [vmem:[%s528 + $0xe] sm:$0x7] %vm532, %v461
        %v534 = vsub.f32 %v460, %v526
        %v535 = vsub.f32 %v461, %v527
        %s536 = scalar_lea.vmem %s178, 48
        %537 = vst.msk [vmem:[%s536 - $0x2] sm:$0xfc] %vm529, %v513
        %538 = vst.msk [vmem:[%s536 + $0x6] sm:$0xff] %vm430, %v534
        %539 = vst.msk [vmem:[%s536 + $0xe] sm:$0x7] %vm532, %v535
        %p540 = scmp.lt.s32.totalorder %s17, 1
        %s541 = scalar_select %p540, %s17, 1
        %s542 = smul.addr %s541, 9
        %s543 = smul.addr %s542, 8
        %s544 = scalar_lea.vmem %s1, %s543
        %p545 = scmp.lt.s32.totalorder %s17, 1
        %s546 = scalar_select %p545, %s17, 1
        %s547 = smul.addr %s546, 9
        %s548 = smul.addr %s547, 8
        %s549 = scalar_lea.vmem %s2, %s548
        // Predicated region
        $region29: #{tpu_custom_call.1} parent=23 // pred_check
          %p550 = pneg %p61
        $region30: #{tpu_custom_call.1} parent=23 // pred_check_branch
          %552 = sbr.rel (%p550) target = $region32
        $region31: #{tpu_custom_call.1} parent=23 // pred_region
          _
        $region32: #{tpu_custom_call.1} parent=23 // pred_fallthru
          _
        // Predicated region
        $region33: #{tpu_custom_call.1} parent=23 // pred_check
          %p553 = pneg %p87
        $region34: #{tpu_custom_call.1} parent=23 // pred_check_branch
          %555 = sbr.rel (%p553) target = $region36
        $region35: #{tpu_custom_call.1} parent=23 // pred_region
          _
        $region36: #{tpu_custom_call.1} parent=23 // pred_fallthru
          _
      $region24: #{tpu_custom_call.1} parent=5 // pred_fallthru
        _
      %p556 = scmp.le.s32.totalorder 2, %s12
      // Predicated region
      $region37: #{tpu_custom_call.1} parent=5 // pred_check
        %p557 = pneg %p556
      $region38: #{tpu_custom_call.1} parent=5 // pred_check_branch
        %559 = sbr.rel (%p557) target = $region40
      $region39: #{tpu_custom_call.1} parent=5 // pred_region
        %s560 = ssub.s32 %s12, 2
        // Predicated region
        $region41: #{tpu_custom_call.1} parent=39 // pred_check
          %p561 = pneg %p67
        $region42: #{tpu_custom_call.1} parent=39 // pred_check_branch
          %563 = sbr.rel (%p561) target = $region44
        $region43: #{tpu_custom_call.1} parent=39 // pred_region
          %p564 = scmp.lt.s32.totalorder %s18, 1
          %s565 = scalar_select %p564, %s18, 1
          %s566 = smul.addr %s565, 9
          %s567 = smul.addr %s566, 8
          %s568 = scalar_lea.vmem %s1, %s567
        $region44: #{tpu_custom_call.1} parent=39 // pred_fallthru
          _
        // Predicated region
        $region45: #{tpu_custom_call.1} parent=39 // pred_check
          %p569 = pneg %p93
        $region46: #{tpu_custom_call.1} parent=39 // pred_check_branch
          %571 = sbr.rel (%p569) target = $region48
        $region47: #{tpu_custom_call.1} parent=39 // pred_region
          %p572 = scmp.lt.s32.totalorder %s18, 1
          %s573 = scalar_select %p572, %s18, 1
          %s574 = smul.addr %s573, 9
          %s575 = smul.addr %s574, 8
          %s576 = scalar_lea.vmem %s2, %s575
        $region48: #{tpu_custom_call.1} parent=39 // pred_fallthru
          _
      $region40: #{tpu_custom_call.1} parent=5 // pred_fallthru
        _
    $region6: #{tpu_custom_call.1} parent=1 // loop_footer
      %s16 = sadd.s32 1, %s12
    $region7: #{tpu_custom_call.1} parent=1 // loop_footer_branch
      %11 = sbr.rel target = $region3
    $region8: #{tpu_custom_call.1} parent=1 // loop_exit
      _
    %577 = vsyncpa [#allocation3], 1
    %s578 = scalar_lea.sflag [#allocation3], 1
    %579 = vsyncpa %s578, 1

</llo_original>
